<compile_context>
chip_gen: v6e
topology: v6e:2x2x1
jax: 0.10.0
libtpu: 0.0.40
codegen_flags: <defaults>
</compile_context>

<pallas_src>
import jax
import jax.numpy as jnp
from jax.experimental import pallas as pl
from jax.experimental.pallas import tpu as pltpu


def spatial_mean_kernel(x_ref, w_ref, b_ref, o_ref):
    # x_ref: (C, T_tile, V)      native-layout block of x (N squeezed)
    # w_ref: (C, 1, out_pad)     Linear weight rows (weight.T), lane-padded
    # b_ref: (1, out_pad)        bias, lane-padded
    # o_ref: (T_tile, out_pad)   lane-dense output block
    C, _, V = x_ref.shape
    inv_v = 1.0 / V

    acc = jnp.zeros(o_ref.shape, jnp.float32)
    # C = number of coordinate axes (3-4): tiny static unroll.
    for c in range(C):
        # mean over V (lane reduction) for coordinate c: (T_tile, 1)
        col = jnp.sum(x_ref[c].astype(jnp.float32), axis=-1, keepdims=True) * inv_v
        # rank-1 update: (T_tile, 1) * (1, out_pad) -> (T_tile, out_pad)
        acc = acc + col * w_ref[c].astype(jnp.float32)
    o_ref[...] = (acc + b_ref[...].astype(jnp.float32)).astype(o_ref.dtype)


def _round_up(v, m):
    return ((v + m - 1) // m) * m


def _pick_t_tile(T, N, cap=256):
    """Largest multiple-of-8 divisor of T up to `cap` (VMEM inflates ~128/V)."""
    t_tile = None
    for cand in (256, 128, 64, 32, 16, 8):
        if cand <= cap and cand <= T and T % cand == 0:
            t_tile = cand
            break
    if t_tile is None:
        return T  # full-T block; legal because block dim == array dim
    # v7x has 2 TensorCores: make sure the parallel grid has >= 2 steps.
    if N * (T // t_tile) < 2 and t_tile >= 16:
        t_tile //= 2
    return t_tile


def spatial_mean_forward(x, weight, bias):
    """x: (N, C, T, V); weight: (out, C) [PyTorch layout]; bias: (out,)."""
    N, C, T, V = x.shape
    out_ch = weight.shape[0]
    out_pad = max(128, _round_up(out_ch, 128))   # lane-dense output store

    T_tile = _pick_t_tile(T, N)
    t_blocks = T // T_tile
    grid = (N, t_blocks)

    # Tiny parameter tensors (a few KB) — the only wrapper-side copies left.
    # Weight as (C, 1, out_pad) so the kernel indexes w_ref[c] -> (1, out_pad).
    w3 = jnp.pad(weight.T, ((0, 0), (0, out_pad - out_ch))).reshape(C, 1, out_pad)
    b2 = jnp.pad(bias, (0, out_pad - out_ch)).reshape(1, out_pad)

    # VMEM budget from actual block footprint (V occupies a full 128-lane row),
    # with double-buffer headroom; clamped so it is safe on v7x (64 MiB VMEM).
    itemsize = x.dtype.itemsize
    x_blk = C * T_tile * max(V, 128) * itemsize
    o_blk = T_tile * out_pad * itemsize
    params = (C + 1) * out_pad * 4
    vmem_limit = int(min(max(4 * (x_blk + o_blk + params), 16 * 2**20), 48 * 2**20))

    y = pl.pallas_call(
        spatial_mean_kernel,
        out_shape=jax.ShapeDtypeStruct((N, T, out_pad), x.dtype),
        grid=grid,
        in_specs=[
            # x read once, directly in its native (N, C, T, V) layout.
            pl.BlockSpec((None, C, T_tile, V), lambda n, t: (n, 0, t, 0)),
            # weight / bias: tiny, constant block across the whole grid.
            pl.BlockSpec((C, 1, out_pad), lambda n, t: (0, 0, 0)),
            pl.BlockSpec((1, out_pad), lambda n, t: (0, 0)),
        ],
        out_specs=pl.BlockSpec((None, T_tile, out_pad), lambda n, t: (n, t, 0)),
        compiler_params=pltpu.CompilerParams(
            dimension_semantics=("parallel", "parallel"),
            vmem_limit_bytes=vmem_limit),
    )(x, w3, b2)

    # Free metadata reshape; the narrow slice (copy of rows*out bytes, small vs
    # the x stream) only happens when out_ch is not already a lane multiple —
    # a consumer that accepts the padded width can take y as-is.
    y = y.reshape(N * T, out_pad)
    return y if out_pad == out_ch else y[:, :out_ch]


if __name__ == "__main__":
    # Small shapes consistent with the module: N batch, C coords, T time, V parts
    N, C, T, V = 2, 4, 16, 16
    out_channels = 32

    key = jax.random.PRNGKey(0)
    kx, kw, kb = jax.random.split(key, 3)

    x = jax.random.normal(kx, (N, C, T, V), dtype=jnp.float32)

    # Deterministic Linear init (PyTorch default: U(-1/sqrt(in), 1/sqrt(in)))
    bound = 1.0 / (C ** 0.5)
    weight = jax.random.uniform(kw, (out_channels, C), dtype=jnp.float32,
                                minval=-bound, maxval=bound)
    bias = jax.random.uniform(kb, (out_channels,), dtype=jnp.float32,
                              minval=-bound, maxval=bound)

    y = spatial_mean_forward(x, weight, bias)
    y = jax.block_until_ready(y)

    # Pure-JAX reference (Dropout is identity in eval mode)
    ref = x.mean(axis=3).transpose(0, 2, 1).reshape(N * T, C) @ weight.T + bias
    assert y.shape == (N * T, out_channels)
    assert jnp.allclose(y, ref, atol=1e-5, rtol=1e-5)

    print("KERNEL_OK")
</pallas_src>

<mosaic_0001>
module attributes {stable_mosaic.version = 11 : i64} {
  func.func @spatial_mean_kernel(%arg0: i32, %arg1: i32, %arg2: memref<1x4x16x16xf32, #tpu.memory_space<vmem>>, %arg3: memref<4x1x128xf32, #tpu.memory_space<vmem>>, %arg4: memref<1x128xf32, #tpu.memory_space<vmem>>, %arg5: memref<1x16x128xf32, #tpu.memory_space<vmem>>) attributes {dimension_semantics = [#tpu.dimension_semantics<parallel>, #tpu.dimension_semantics<parallel>], iteration_bounds = array<i64: 2, 1>, scalar_prefetch = 0 : i64, scratch_operands = 0 : i64, tpu.core_type = #tpu.core_type<tc>, window_params = [{transform_indices = @transform_0, window_bounds = array<i64: 1, 4, 16, 16>}, {pipeline_mode = #tpu.pipeline_mode<synchronous>, transform_indices = @transform_1, window_bounds = array<i64: 4, 1, 128>}, {pipeline_mode = #tpu.pipeline_mode<synchronous>, transform_indices = @transform_2, window_bounds = array<i64: 1, 128>}, {transform_indices = @transform_3, window_bounds = array<i64: 1, 16, 128>}]} {
    %cst = arith.constant 0.000000e+00 : f32
    %0 = vector.broadcast %cst : f32 to vector<16x128xf32>
    %c0 = arith.constant 0 : index
    %c0_0 = arith.constant 0 : index
    %c0_1 = arith.constant 0 : index
    %c0_2 = arith.constant 0 : index
    %1 = vector.load %arg2[%c0, %c0_0, %c0_1, %c0_2] : memref<1x4x16x16xf32, #tpu.memory_space<vmem>>, vector<1x1x16x16xf32>
    %2 = vector.shape_cast %1 : vector<1x1x16x16xf32> to vector<16x16xf32>
    %cst_3 = arith.constant dense<0.000000e+00> : vector<16xf32>
    %3 = vector.multi_reduction <add>, %2, %cst_3 [1] : vector<16x16xf32> to vector<16xf32>
    %4 = vector.shape_cast %3 : vector<16xf32> to vector<16x1xf32>
    %cst_4 = arith.constant 6.250000e-02 : f32
    %5 = vector.broadcast %cst_4 : f32 to vector<16x1xf32>
    %6 = arith.mulf %4, %5 : vector<16x1xf32>
    %c0_5 = arith.constant 0 : index
    %c0_6 = arith.constant 0 : index
    %c0_7 = arith.constant 0 : index
    %7 = vector.load %arg3[%c0_5, %c0_6, %c0_7] : memref<4x1x128xf32, #tpu.memory_space<vmem>>, vector<1x1x128xf32>
    %8 = vector.shape_cast %7 : vector<1x1x128xf32> to vector<1x128xf32>
    %9 = vector.broadcast %6 : vector<16x1xf32> to vector<16x128xf32>
    %10 = vector.broadcast %8 : vector<1x128xf32> to vector<16x128xf32>
    %11 = arith.mulf %9, %10 : vector<16x128xf32>
    %12 = arith.addf %0, %11 : vector<16x128xf32>
    %c0_8 = arith.constant 0 : index
    %c1 = arith.constant 1 : index
    %c0_9 = arith.constant 0 : index
    %c0_10 = arith.constant 0 : index
    %13 = vector.load %arg2[%c0_8, %c1, %c0_9, %c0_10] : memref<1x4x16x16xf32, #tpu.memory_space<vmem>>, vector<1x1x16x16xf32>
    %14 = vector.shape_cast %13 : vector<1x1x16x16xf32> to vector<16x16xf32>
    %cst_11 = arith.constant dense<0.000000e+00> : vector<16xf32>
    %15 = vector.multi_reduction <add>, %14, %cst_11 [1] : vector<16x16xf32> to vector<16xf32>
    %16 = vector.shape_cast %15 : vector<16xf32> to vector<16x1xf32>
    %cst_12 = arith.constant 6.250000e-02 : f32
    %17 = vector.broadcast %cst_12 : f32 to vector<16x1xf32>
    %18 = arith.mulf %16, %17 : vector<16x1xf32>
    %c1_13 = arith.constant 1 : index
    %c0_14 = arith.constant 0 : index
    %c0_15 = arith.constant 0 : index
    %19 = vector.load %arg3[%c1_13, %c0_14, %c0_15] : memref<4x1x128xf32, #tpu.memory_space<vmem>>, vector<1x1x128xf32>
    %20 = vector.shape_cast %19 : vector<1x1x128xf32> to vector<1x128xf32>
    %21 = vector.broadcast %18 : vector<16x1xf32> to vector<16x128xf32>
    %22 = vector.broadcast %20 : vector<1x128xf32> to vector<16x128xf32>
    %23 = arith.mulf %21, %22 : vector<16x128xf32>
    %24 = arith.addf %12, %23 : vector<16x128xf32>
    %c0_16 = arith.constant 0 : index
    %c2 = arith.constant 2 : index
    %c0_17 = arith.constant 0 : index
    %c0_18 = arith.constant 0 : index
    %25 = vector.load %arg2[%c0_16, %c2, %c0_17, %c0_18] : memref<1x4x16x16xf32, #tpu.memory_space<vmem>>, vector<1x1x16x16xf32>
    %26 = vector.shape_cast %25 : vector<1x1x16x16xf32> to vector<16x16xf32>
    %cst_19 = arith.constant dense<0.000000e+00> : vector<16xf32>
    %27 = vector.multi_reduction <add>, %26, %cst_19 [1] : vector<16x16xf32> to vector<16xf32>
    %28 = vector.shape_cast %27 : vector<16xf32> to vector<16x1xf32>
    %cst_20 = arith.constant 6.250000e-02 : f32
    %29 = vector.broadcast %cst_20 : f32 to vector<16x1xf32>
    %30 = arith.mulf %28, %29 : vector<16x1xf32>
    %c2_21 = arith.constant 2 : index
    %c0_22 = arith.constant 0 : index
    %c0_23 = arith.constant 0 : index
    %31 = vector.load %arg3[%c2_21, %c0_22, %c0_23] : memref<4x1x128xf32, #tpu.memory_space<vmem>>, vector<1x1x128xf32>
    %32 = vector.shape_cast %31 : vector<1x1x128xf32> to vector<1x128xf32>
    %33 = vector.broadcast %30 : vector<16x1xf32> to vector<16x128xf32>
    %34 = vector.broadcast %32 : vector<1x128xf32> to vector<16x128xf32>
    %35 = arith.mulf %33, %34 : vector<16x128xf32>
    %36 = arith.addf %24, %35 : vector<16x128xf32>
    %c0_24 = arith.constant 0 : index
    %c3 = arith.constant 3 : index
    %c0_25 = arith.constant 0 : index
    %c0_26 = arith.constant 0 : index
    %37 = vector.load %arg2[%c0_24, %c3, %c0_25, %c0_26] : memref<1x4x16x16xf32, #tpu.memory_space<vmem>>, vector<1x1x16x16xf32>
    %38 = vector.shape_cast %37 : vector<1x1x16x16xf32> to vector<16x16xf32>
    %cst_27 = arith.constant dense<0.000000e+00> : vector<16xf32>
    %39 = vector.multi_reduction <add>, %38, %cst_27 [1] : vector<16x16xf32> to vector<16xf32>
    %40 = vector.shape_cast %39 : vector<16xf32> to vector<16x1xf32>
    %cst_28 = arith.constant 6.250000e-02 : f32
    %41 = vector.broadcast %cst_28 : f32 to vector<16x1xf32>
    %42 = arith.mulf %40, %41 : vector<16x1xf32>
    %c3_29 = arith.constant 3 : index
    %c0_30 = arith.constant 0 : index
    %c0_31 = arith.constant 0 : index
    %43 = vector.load %arg3[%c3_29, %c0_30, %c0_31] : memref<4x1x128xf32, #tpu.memory_space<vmem>>, vector<1x1x128xf32>
    %44 = vector.shape_cast %43 : vector<1x1x128xf32> to vector<1x128xf32>
    %45 = vector.broadcast %42 : vector<16x1xf32> to vector<16x128xf32>
    %46 = vector.broadcast %44 : vector<1x128xf32> to vector<16x128xf32>
    %47 = arith.mulf %45, %46 : vector<16x128xf32>
    %48 = arith.addf %36, %47 : vector<16x128xf32>
    %c0_32 = arith.constant 0 : index
    %c0_33 = arith.constant 0 : index
    %49 = vector.load %arg4[%c0_32, %c0_33] : memref<1x128xf32, #tpu.memory_space<vmem>>, vector<1x128xf32>
    %50 = vector.broadcast %49 : vector<1x128xf32> to vector<16x128xf32>
    %51 = arith.addf %48, %50 : vector<16x128xf32>
    %c0_34 = arith.constant 0 : index
    %c0_35 = arith.constant 0 : index
    %c0_36 = arith.constant 0 : index
    %52 = vector.load %arg5[%c0_34, %c0_35, %c0_36] : memref<1x16x128xf32, #tpu.memory_space<vmem>>, vector<1x16x128xf32>
    %53 = vector.shape_cast %52 : vector<1x16x128xf32> to vector<16x128xf32>
    %54 = vector.shape_cast %51 : vector<16x128xf32> to vector<1x16x128xf32>
    tpu.vector_store %arg5[%c0_34, %c0_35, %c0_36], %54 {strides = array<i32>} : memref<1x16x128xf32, #tpu.memory_space<vmem>>, vector<1x16x128xf32>,
    return
  }
  func.func @transform_0(%arg0: i32, %arg1: i32) -> (i32, i32, i32, i32) {
    %c0_i32 = arith.constant 0 : i32
    %c0_i32_0 = arith.constant 0 : i32
    %c0_i32_1 = arith.constant 0 : i32
    return %arg0, %c0_i32, %arg1, %c0_i32_0 : i32, i32, i32, i32
  }
  func.func @transform_1(%arg0: i32, %arg1: i32) -> (i32, i32, i32) {
    %c0_i32 = arith.constant 0 : i32
    %c0_i32_0 = arith.constant 0 : i32
    %c0_i32_1 = arith.constant 0 : i32
    %c0_i32_2 = arith.constant 0 : i32
    return %c0_i32, %c0_i32_0, %c0_i32_1 : i32, i32, i32
  }
  func.func @transform_2(%arg0: i32, %arg1: i32) -> (i32, i32) {
    %c0_i32 = arith.constant 0 : i32
    %c0_i32_0 = arith.constant 0 : i32
    %c0_i32_1 = arith.constant 0 : i32
    return %c0_i32, %c0_i32_0 : i32, i32
  }
  func.func @transform_3(%arg0: i32, %arg1: i32) -> (i32, i32, i32) {
    %c0_i32 = arith.constant 0 : i32
    %c0_i32_0 = arith.constant 0 : i32
    return %arg0, %arg1, %c0_i32 : i32, i32, i32
  }
}

</mosaic_0001>

<llo_original>
// kernel: tpu_custom_call.1
$region0: #{tpu_custom_call.1}
  #allocation0 [shape = 'u32[]', space=smem, size = 0x4, offset = 0x4, fixed_abs, tag = 'smem constant byte address 0x4 - core index']
  #allocation1 [shape = 'u32[144,128]{1,0:T(1,128)}', space=vmem, size = 0x12000, scoped, tag = 'internal scratch']
  %s0 = inlined_call_operand.hbm [shape: f32[2,4,16,16], index: 0, kind: input, shape index: {}]
  %s1 = inlined_call_operand.hbm [shape: f32[4,1,128], index: 1, kind: input, shape index: {}]
  %s2 = inlined_call_operand.vmem [shape: f32[1,128], index: 2, kind: input, shape index: {}]
  %s3 = inlined_call_operand.hbm [shape: f32[2,16,128], index: 3, kind: output, shape index: {}]
  %s4 = sld [smem:[#allocation0]]
  $region53: #{tpu_custom_call.1} parent=0
    _
  %s6 = ssub.s32 1, %s4
  %s7 = scalar_select 0, %s6, %s4
  $region1: #{tpu_custom_call.1} parent=0
    #allocation2 [shape = 'u8[65536]{0}', space=vmem, size = 0x10000, scoped, tag = 'input window, operand 0']
    #allocation3 [shape = 's32[2]{0}', space=sflag, size = 0x8, scoped, tag = 'scoped memory for tpu_custom_call.1']
    #allocation4 [shape = 's32[2]{0}', space=sflag, size = 0x8, scoped, tag = 'scoped memory for tpu_custom_call.1']
    #allocation5 [shape = 'u8[2048]{0}', space=vmem, size = 0x800, scoped, tag = 'input window, operand 1, single buffered']
    #allocation6 [shape = 's32[1]{0}', space=sflag, size = 0x4, scoped, tag = 'scoped memory for tpu_custom_call.1']
    #allocation7 [shape = 'u8[16384]{0}', space=vmem, size = 0x4000, scoped, tag = 'output window, operand 0']
    %8 = vsyncpa [#allocation3], 0
    %s9 = scalar_lea.sflag [#allocation3], 1
    %10 = vsyncpa %s9, 0
    %11 = vsyncpa [#allocation6], 0
    %12 = vsyncpa [#allocation4], 0
    %s13 = scalar_lea.sflag [#allocation4], 1
    %14 = vsyncpa %s13, 0
    loop: start=0, step=1, limit=4
    $region2: #{tpu_custom_call.1} parent=1 // loop_pre_header
      _
    $region3: #{tpu_custom_call.1} parent=1 // loop_header
      %s16 = sphi 0, %s20
      %p17 = scmp.ge.s32.totalorder %s16, 4
      %s23 = sphi 0, %s35
      %s24 = sphi 0, %s31
      %s25 = sphi 0, %s23
      %s26 = sphi 0, %s24
      %s27 = sphi 0, %s25
      %s28 = sphi 0, %s26
      %s40 = sphi 0, %s42
      %s43 = sphi 0, %s40
      %s44 = sphi 0, %s43
      %s60 = sphi 0, %s44
      %s64 = sphi 0, %s64
      %s66 = sphi 0, %s64
      %s67 = sphi 0, %s66
      %s81 = sphi 0, %s67
      %s85 = sphi 0, %s85
      %s87 = sphi 0, %s85
      %s88 = sphi 0, %s87
      %s102 = sphi 0, %s88
      %s110 = sphi 0, %s112
      %s113 = sphi 0, %s110
      %s114 = sphi 0, %s113
      %s130 = sphi 0, %s114
    $region4: #{tpu_custom_call.1} parent=1 // loop_header_branch
      %19 = sbr.rel (%p17) target = $region8
    $region5: #{tpu_custom_call.1} parent=1 // loop_body
      %s21 = ssub.s32 %s16, 1
      %s22 = ssub.s32 %s16, 2
      %s29 = sadd.s32 1, %s24
      %p30 = scmp.ge.s32.totalorder %s29, 1
      %s31 = scalar_select %p30, 0, %s29
      %s32 = sadd.s32 1, %s23
      %s33 = scalar_select %p30, %s32, %s23
      %p34 = scmp.ge.s32.totalorder %s33, 2
      %s35 = scalar_select %p34, 0, %s33
      %s36 = ssub.s32 %s23, %s35
      %s37 = ssub.s32 %s24, %s31
      %s38 = sor.u32 %s36, %s37
      %p39 = scmp.eq.s32.totalorder %s38, 0
      %s41 = sadd.s32 %s40, 1
      %s42 = scalar_select %p39, %s40, %s41
      %p45 = pneg %p39
      %p46 = scmp.eq.s32.totalorder %s16, 1
      %p47 = por %p45, %p46
      %p48 = scmp.ne.s32.totalorder %s40, %s43
      %p49 = scmp.eq.s32.totalorder %s16, 0
      %p50 = por %p48, %p49
      %p51 = scmp.ne.s32.totalorder %s40, %s43
      %p52 = scmp.eq.s32.totalorder %s21, 1
      %p53 = por %p51, %p52
      %p54 = scmp.ne.s32.totalorder %s43, %s44
      %p55 = scmp.eq.s32.totalorder %s21, 0
      %p56 = por %p54, %p55
      %p57 = scmp.ne.s32.totalorder %s43, %s44
      %p58 = scmp.eq.s32.totalorder %s22, 1
      %p59 = por %p57, %p58
      %p61 = scmp.ne.s32.totalorder %s44, %s60
      %p62 = scmp.eq.s32.totalorder %s22, 0
      %p63 = por %p61, %p62
      %s65 = sadd.s32 %s64, 1
      %p68 = scmp.eq.s32.totalorder %s16, 1
      %p69 = scmp.ne.s32.totalorder %s64, %s66
      %p70 = scmp.eq.s32.totalorder %s16, 0
      %p71 = por %p69, %p70
      %p72 = scmp.ne.s32.totalorder %s64, %s66
      %p73 = scmp.eq.s32.totalorder %s21, 1
      %p74 = por %p72, %p73
      %p75 = scmp.ne.s32.totalorder %s66, %s67
      %p76 = scmp.eq.s32.totalorder %s21, 0
      %p77 = por %p75, %p76
      %p78 = scmp.ne.s32.totalorder %s66, %s67
      %p79 = scmp.eq.s32.totalorder %s22, 1
      %p80 = por %p78, %p79
      %p82 = scmp.ne.s32.totalorder %s67, %s81
      %p83 = scmp.eq.s32.totalorder %s22, 0
      %p84 = por %p82, %p83
      %s86 = sadd.s32 %s85, 1
      %p89 = scmp.eq.s32.totalorder %s16, 1
      %p90 = scmp.ne.s32.totalorder %s85, %s87
      %p91 = scmp.eq.s32.totalorder %s16, 0
      %p92 = por %p90, %p91
      %p93 = scmp.ne.s32.totalorder %s85, %s87
      %p94 = scmp.eq.s32.totalorder %s21, 1
      %p95 = por %p93, %p94
      %p96 = scmp.ne.s32.totalorder %s87, %s88
      %p97 = scmp.eq.s32.totalorder %s21, 0
      %p98 = por %p96, %p97
      %p99 = scmp.ne.s32.totalorder %s87, %s88
      %p100 = scmp.eq.s32.totalorder %s22, 1
      %p101 = por %p99, %p100
      %p103 = scmp.ne.s32.totalorder %s88, %s102
      %p104 = scmp.eq.s32.totalorder %s22, 0
      %p105 = por %p103, %p104
      %s106 = ssub.s32 %s23, %s35
      %s107 = ssub.s32 %s24, %s31
      %s108 = sor.u32 %s106, %s107
      %p109 = scmp.eq.s32.totalorder %s108, 0
      %s111 = sadd.s32 %s110, 1
      %s112 = scalar_select %p109, %s110, %s111
      %p115 = pneg %p109
      %p116 = scmp.eq.s32.totalorder %s16, 1
      %p117 = por %p115, %p116
      %p118 = scmp.ne.s32.totalorder %s110, %s113
      %p119 = scmp.eq.s32.totalorder %s16, 0
      %p120 = por %p118, %p119
      %p121 = scmp.ne.s32.totalorder %s110, %s113
      %p122 = scmp.eq.s32.totalorder %s21, 1
      %p123 = por %p121, %p122
      %p124 = scmp.ne.s32.totalorder %s113, %s114
      %p125 = scmp.eq.s32.totalorder %s21, 0
      %p126 = por %p124, %p125
      %p127 = scmp.ne.s32.totalorder %s113, %s114
      %p128 = scmp.eq.s32.totalorder %s22, 1
      %p129 = por %p127, %p128
      %p131 = scmp.ne.s32.totalorder %s114, %s130
      %p132 = scmp.eq.s32.totalorder %s22, 0
      %p133 = por %p131, %p132
      %p134 = scmp.le.s32.totalorder 1, %s16
      %p135 = scmp.lt.s32.totalorder %s16, 3
      %p136 = pnand %p134, %p135
      %p137 = pneg %p136
      // Predicated region
      $region9: #{tpu_custom_call.1} parent=5 // pred_check
        _
      $region10: #{tpu_custom_call.1} parent=5 // pred_check_branch
        %139 = sbr.rel (%p136) target = $region12
      $region11: #{tpu_custom_call.1} parent=5 // pred_region
        %s140 = ssub.s32 %s16, 1
        // Predicated region
        $region13: #{tpu_custom_call.1} parent=11 // pred_check
          %p141 = pneg %p77
        $region14: #{tpu_custom_call.1} parent=11 // pred_check_branch
          %143 = sbr.rel (%p141) target = $region16
        $region15: #{tpu_custom_call.1} parent=11 // pred_region
          %s145 = ssub.s32 64, 64
          %146 = vsyncadd [#allocation6], %s145
          %s147 = sshll.u32 [#allocation5], 4
          %s148 = int_to_ptr.vmem [resolvable:$true] %s147
          %153 = dma.hbm_to_vmem [thread:$0]  %s1, 64, %s148, [#allocation6], 16, 16, 1
        $region16: #{tpu_custom_call.1} parent=11 // pred_fallthru
          _
        // Predicated region
        $region17: #{tpu_custom_call.1} parent=11 // pred_check
          %p154 = pneg %p98
        $region18: #{tpu_custom_call.1} parent=11 // pred_check_branch
          %156 = sbr.rel (%p154) target = $region20
        $region19: #{tpu_custom_call.1} parent=11 // pred_region
          _
        $region20: #{tpu_custom_call.1} parent=11 // pred_fallthru
          _
      $region12: #{tpu_custom_call.1} parent=5 // pred_fallthru
        _
      %p157 = scmp.lt.s32.totalorder %s16, 2
      // Predicated region
      $region21: #{tpu_custom_call.1} parent=5 // pred_check
        %p158 = pneg %p157
      $region22: #{tpu_custom_call.1} parent=5 // pred_check_branch
        %160 = sbr.rel (%p158) target = $region24
      $region23: #{tpu_custom_call.1} parent=5 // pred_region
        // Predicated region
        $region25: #{tpu_custom_call.1} parent=23 // pred_check
          %p161 = pneg %p50
        $region26: #{tpu_custom_call.1} parent=23 // pred_check_branch
          %163 = sbr.rel (%p161) target = $region28
        $region27: #{tpu_custom_call.1} parent=23 // pred_region
          %s164 = sand.u32 %s40, 1
          %s165 = scalar_lea.sflag [#allocation3], %s164
          %s166 = sand.u32 %s40, 1
          %s167 = smul.addr %s166, 64
          %s168 = scalar_lea.vmem [#allocation2], %s167
          %s169 = smul.u32 2, %s24
          %s171 = ssub.s32 1024, 1024
          %172 = vsyncadd %s165, %s171
          %s173 = smul.addr %s23, 8
          %s174 = sadd.s32 %s169, %s173
          %s175 = smul.addr %s174, 128
          %s176 = scalar_lea.hbm %s0, %s175
          %s177 = sshll.u32 %s168, 4
          %s178 = int_to_ptr.vmem [resolvable:$true] %s177
          %183 = dma.hbm_to_vmem [thread:$0]  %s176, 1024, %s178, %s165, 128, 128, 8
        $region28: #{tpu_custom_call.1} parent=23 // pred_fallthru
          _
      $region24: #{tpu_custom_call.1} parent=5 // pred_fallthru
        _
      %p184 = scmp.le.s32.totalorder 1, %s16
      %p185 = scmp.lt.s32.totalorder %s16, 3
      %p186 = pnand %p184, %p185
      %p187 = pneg %p186
      // Predicated region
      $region29: #{tpu_custom_call.1} parent=5 // pred_check
        _
      $region30: #{tpu_custom_call.1} parent=5 // pred_check_branch
        %189 = sbr.rel (%p186) target = $region32
      $region31: #{tpu_custom_call.1} parent=5 // pred_region
        %s190 = ssub.s32 %s16, 1
        %s191 = sand.u32 %s43, 1
        %s192 = scalar_lea.sflag [#allocation3], %s191
        %s193 = sand.u32 %s43, 1
        %s194 = smul.addr %s193, 64
        %s195 = scalar_lea.vmem [#allocation2], %s194
        // Predicated region
        $region33: #{tpu_custom_call.1} parent=31 // pred_check
          %p196 = pneg %p56
        $region34: #{tpu_custom_call.1} parent=31 // pred_check_branch
          %198 = sbr.rel (%p196) target = $region36
        $region35: #{tpu_custom_call.1} parent=31 // pred_region
          %199 = dma.done %s192, 1024
        $region36: #{tpu_custom_call.1} parent=31 // pred_fallthru
          _
        // Predicated region
        $region37: #{tpu_custom_call.1} parent=31 // pred_check
          %p200 = pneg %p77
        $region38: #{tpu_custom_call.1} parent=31 // pred_check_branch
          %202 = sbr.rel (%p200) target = $region40
        $region39: #{tpu_custom_call.1} parent=31 // pred_region
          %203 = dma.done [#allocation6], 64
        $region40: #{tpu_custom_call.1} parent=31 // pred_fallthru
          _
        %s204 = sand.u32 %s43, 1
        %s205 = scalar_lea.sflag [#allocation3], %s204
        %s206 = sand.u32 %s43, 1
        %s207 = smul.addr %s206, 64
        %s208 = scalar_lea.vmem [#allocation2], %s207
        %p209 = pneg %p56
        %p210 = pneg %p53
        %p211 = pneg %p77
        %p212 = pneg %p74
        %p213 = pneg %p98
        %p214 = pneg %p95
        %p215 = pneg %p126
        %p216 = pneg %p123
        %s217 = sand.u32 %s113, 1
        %s218 = scalar_lea.sflag [#allocation4], %s217
        %s219 = sand.u32 %s113, 1
        %s220 = smul.addr %s219, 16
        %s221 = scalar_lea.vmem [#allocation7], %s220
        %s222 = smul.u32 2, %s26
        %s223 = smul.u32 2, %s26
        %v224 = vld [vmem:[%s195] sm:$0xff]
        %v225 = vld [vmem:[%s195 + $0x8] sm:$0xff]
        %vm226 = vcmask 130048
        %v227 = vsel %vm226, %v224, 0.0
        %228 = vadd.xlane.f32.xlu0 %v227
        %v229 = vpop.xlane.xlu0 %228
        %v230 = vsel %vm226, %v225, 0.0
        %231 = vadd.xlane.f32.xlu0 %v230
        %v232 = vpop.xlane.xlu0 %231
        %v233 = vmul.f32 %v229, 0.0625
        %v234 = vmul.f32 %v232, 0.0625
        %v235 = vld [vmem:[#allocation5] sm:$0x1]
        %v237 = vlaneseq
        %v238 = vshrl.u32 %v237, 7
        %v239 = vsub.s32 0, %v238
        %v240 = vrot.slane %v235, %v239
        %v242 = vmul.f32 %v233, %v240
        %v243 = vmul.f32 %v234, %v240
        %v244 = vadd.f32 %v242, 0.0
        %v245 = vadd.f32 %v243, 0.0
        %s246 = scalar_lea.vmem %s195, 16 [#allocation2]
        %v247 = vld [vmem:[%s246] sm:$0xff]
        %v248 = vld [vmem:[%s246 + $0x8] sm:$0xff]
        %v249 = vsel %vm226, %v247, 0.0
        %250 = vadd.xlane.f32.xlu0 %v249
        %v251 = vpop.xlane.xlu0 %250
        %v252 = vsel %vm226, %v248, 0.0
        %253 = vadd.xlane.f32.xlu0 %v252
        %v254 = vpop.xlane.xlu0 %253
        %v255 = vmul.f32 %v251, 0.0625
        %v256 = vmul.f32 %v254, 0.0625
        %s257 = scalar_lea.vmem [#allocation5], 1
        %v258 = vld [vmem:[%s257] sm:$0x1]
        %v260 = vlaneseq
        %v261 = vshrl.u32 %v260, 7
        %v262 = vsub.s32 0, %v261
        %v263 = vrot.slane %v258, %v262
        %v265 = vmul.f32 %v255, %v263
        %v266 = vmul.f32 %v256, %v263
        %v267 = vadd.f32 %v244, %v265
        %v268 = vadd.f32 %v245, %v266
        %s269 = scalar_lea.vmem %s195, 32 [#allocation2]
        %v270 = vld [vmem:[%s269] sm:$0xff]
        %v271 = vld [vmem:[%s269 + $0x8] sm:$0xff]
        %v272 = vsel %vm226, %v270, 0.0
        %273 = vadd.xlane.f32.xlu0 %v272
        %v274 = vpop.xlane.xlu0 %273
        %v275 = vsel %vm226, %v271, 0.0
        %276 = vadd.xlane.f32.xlu0 %v275
        %v277 = vpop.xlane.xlu0 %276
        %v278 = vmul.f32 %v274, 0.0625
        %v279 = vmul.f32 %v277, 0.0625
        %s280 = scalar_lea.vmem [#allocation5], 2
        %v281 = vld [vmem:[%s280] sm:$0x1]
        %v283 = vlaneseq
        %v284 = vshrl.u32 %v283, 7
        %v285 = vsub.s32 0, %v284
        %v286 = vrot.slane %v281, %v285
        %v288 = vmul.f32 %v278, %v286
        %v289 = vmul.f32 %v279, %v286
        %v290 = vadd.f32 %v267, %v288
        %v291 = vadd.f32 %v268, %v289
        %s292 = scalar_lea.vmem %s195, 48 [#allocation2]
        %v293 = vld [vmem:[%s292] sm:$0xff]
        %v294 = vld [vmem:[%s292 + $0x8] sm:$0xff]
        %v295 = vsel %vm226, %v293, 0.0
        %296 = vadd.xlane.f32.xlu0 %v295
        %v297 = vpop.xlane.xlu0 %296
        %v298 = vsel %vm226, %v294, 0.0
        %299 = vadd.xlane.f32.xlu0 %v298
        %v300 = vpop.xlane.xlu0 %299
        %v301 = vmul.f32 %v297, 0.0625
        %v302 = vmul.f32 %v300, 0.0625
        %s303 = scalar_lea.vmem [#allocation5], 3
        %v304 = vld [vmem:[%s303] sm:$0x1]
        %v306 = vlaneseq
        %v307 = vshrl.u32 %v306, 7
        %v308 = vsub.s32 0, %v307
        %v309 = vrot.slane %v304, %v308
        %v311 = vmul.f32 %v301, %v309
        %v312 = vmul.f32 %v302, %v309
        %v313 = vadd.f32 %v290, %v311
        %v314 = vadd.f32 %v291, %v312
        %v315 = vld [vmem:[%s2] sm:$0x1]
        %v317 = vlaneseq
        %v318 = vshrl.u32 %v317, 7
        %v319 = vsub.s32 0, %v318
        %v320 = vrot.slane %v315, %v319
        %v322 = vadd.f32 %v313, %v320
        %v323 = vadd.f32 %v314, %v320
        %324 = vst [vmem:[%s221] sm:$0xff] %v322
        %325 = vst [vmem:[%s221 + $0x8] sm:$0xff] %v323
        %s326 = sand.u32 %s113, 1
        %s327 = scalar_lea.sflag [#allocation4], %s326
        %s328 = sand.u32 %s113, 1
        %s329 = smul.addr %s328, 16
        %s330 = scalar_lea.vmem [#allocation7], %s329
        // Predicated region
        $region41: #{tpu_custom_call.1} parent=31 // pred_check
          %p331 = pneg %p123
        $region42: #{tpu_custom_call.1} parent=31 // pred_check_branch
          %333 = sbr.rel (%p331) target = $region44
        $region43: #{tpu_custom_call.1} parent=31 // pred_region
          %s334 = smul.u32 2, %s26
          %s336 = ssub.s32 256, 256
          %337 = vsyncadd %s327, %s336
          %s338 = smul.addr %s25, 2
          %s339 = sadd.s32 %s334, %s338
          %s340 = smul.addr %s339, 128
          %s341 = scalar_lea.hbm %s3, %s340
          %s342 = sshll.u32 %s330, 4
          %s343 = int_to_ptr.vmem [resolvable:$true] %s342
          %348 = dma.vmem_to_hbm [thread:$0]  %s343, 256, %s341, %s327, 128, 128, 8
        $region44: #{tpu_custom_call.1} parent=31 // pred_fallthru
          _
      $region32: #{tpu_custom_call.1} parent=5 // pred_fallthru
        _
      %p349 = scmp.le.s32.totalorder 2, %s16
      // Predicated region
      $region45: #{tpu_custom_call.1} parent=5 // pred_check
        %p350 = pneg %p349
      $region46: #{tpu_custom_call.1} parent=5 // pred_check_branch
        %352 = sbr.rel (%p350) target = $region48
      $region47: #{tpu_custom_call.1} parent=5 // pred_region
        %s353 = ssub.s32 %s16, 2
        // Predicated region
        $region49: #{tpu_custom_call.1} parent=47 // pred_check
          %p354 = pneg %p129
        $region50: #{tpu_custom_call.1} parent=47 // pred_check_branch
          %356 = sbr.rel (%p354) target = $region52
        $region51: #{tpu_custom_call.1} parent=47 // pred_region
          %s357 = sand.u32 %s114, 1
          %s358 = scalar_lea.sflag [#allocation4], %s357
          %s359 = sand.u32 %s114, 1
          %s360 = smul.addr %s359, 16
          %s361 = scalar_lea.vmem [#allocation7], %s360
          %362 = dma.done %s358, 256
        $region52: #{tpu_custom_call.1} parent=47 // pred_fallthru
          _
      $region48: #{tpu_custom_call.1} parent=5 // pred_fallthru
        _
    $region6: #{tpu_custom_call.1} parent=1 // loop_footer
      %s20 = sadd.s32 1, %s16
    $region7: #{tpu_custom_call.1} parent=1 // loop_footer_branch
      %15 = sbr.rel target = $region3
    $region8: #{tpu_custom_call.1} parent=1 // loop_exit
      _
    %363 = vsyncpa [#allocation3], 1
    %s364 = scalar_lea.sflag [#allocation3], 1
    %365 = vsyncpa %s364, 1
    %366 = vsyncpa [#allocation6], 1
    %367 = vsyncpa [#allocation4], 1
    %s368 = scalar_lea.sflag [#allocation4], 1
    %369 = vsyncpa %s368, 1

</llo_original>
